<compile_context>
chip_gen: v5e
topology: v5e:2x2
jax: 0.10.0
libtpu: 0.0.40
codegen_flags: <defaults>
</compile_context>

<pallas_src>
import jax
import jax.numpy as jnp
from jax.experimental import pallas as pl
from jax.experimental.pallas import tpu as pltpu


def cfrnet_kernel(x_ref, t_ref, w1x_ref, w1t_ref, b1_ref,
                  w2_ref, b2_ref, wh_ref, bh_ref, out_ref):
    cdt = w2_ref.dtype  # MXU compute dtype (f32 or bf16)
    # Encoder layer 1: (H, d_in) @ (d_in, TB) on the MXU; the concat([x, t]) of
    # the reference module is fused in as a rank-1 outer-product VPU update.
    h = jnp.dot(w1x_ref[...], x_ref[...], preferred_element_type=jnp.float32)
    h = jnp.maximum(h + w1t_ref[...] * t_ref[...] + b1_ref[...], 0.0)
    # Encoder layer 2 + ReLU.
    h = jnp.dot(w2_ref[...], h.astype(cdt), preferred_element_type=jnp.float32)
    h = jnp.maximum(h + b2_ref[...], 0.0)
    # Both heads fused into a single (2, H) @ (H, TB) matmul.
    out_ref[...] = (jnp.dot(wh_ref[...], h.astype(cdt),
                            preferred_element_type=jnp.float32) + bh_ref[...])


def _pad_to(n, m):
    return ((n + m - 1) // m) * m


def _choose_tiling(batch, d_in, itemsize, target_tile, vmem_budget):
    """Pick (padded_batch, tile_b, n_tiles) with 128-lane granularity."""
    bp128 = _pad_to(batch, 128)
    # Bytes per batch column for the double-buffered x / t / out streams
    # (sublane dims round up to 8; t and out are kept in f32).
    per_col = 2 * (_pad_to(d_in, 8) * itemsize + 8 * 4 + 8 * 4)
    max_tile_vmem = max(128, (vmem_budget // max(per_col, 1)) // 128 * 128)
    tile_cap = max(128, min(_pad_to(target_tile, 128), max_tile_vmem))
    n_tiles = max(1, -(-bp128 // tile_cap))
    # v7x megacore: give both TensorCores a grid step when there is enough batch.
    if n_tiles == 1 and bp128 >= 256:
        n_tiles = 2
    tile_b = _pad_to(-(-bp128 // n_tiles), 128)
    return n_tiles * tile_b, tile_b, n_tiles


def cfrnet_forward(x, t, params, *, tile_b=4096, compute_dtype=jnp.float32):
    """x: (B, input_dim), t: (B,)  ->  (mu0, mu1) each (B, 1) float32."""
    w1x, w1t, b1, w2, b2, wh, bh = params   # already stored transposed (W^T)
    B, d_in = x.shape
    H = w2.shape[0]
    itemsize = jnp.dtype(compute_dtype).itemsize

    # --- generation-aware VMEM budgeting (v7x has 64 MiB physical VMEM) ---
    try:
        vmem_cap = int(pltpu.get_tpu_info().vmem_capacity_bytes)
    except Exception:
        vmem_cap = 64 * 1024 * 1024   # conservative default
    budget = min(max(vmem_cap // 2, 32 << 20), 96 << 20)

    Bp, tb, n_tiles = _choose_tiling(B, d_in, itemsize, tile_b, budget)

    # --- lane-dense transposed operands ---
    xT = x.astype(compute_dtype).T                      # (d_in, B), batch on lanes
    tT = t.reshape(1, B).astype(jnp.float32)            # (1, B), lane-dense
    if Bp != B:
        xT = jnp.pad(xT, ((0, 0), (0, Bp - B)))
        tT = jnp.pad(tT, ((0, 0), (0, Bp - B)))
    w1x_c = w1x.astype(compute_dtype)                   # (H, d_in)  MXU weights
    w2_c = w2.astype(compute_dtype)                     # (H, H)
    wh_c = wh.astype(compute_dtype)                     # (2, H)
    # w1t / b1 / b2 / bh stay f32 (elementwise path; v5e VPU has no bf16).

    # --- VMEM usage estimate -> vmem_limit_bytes ---
    stream_bytes = 2 * tb * (_pad_to(d_in, 8) * itemsize + 8 * 4 + 8 * 4)
    weight_bytes = 2 * ((_pad_to(H, 8) * _pad_to(d_in, 128)
                         + _pad_to(H, 8) * _pad_to(H, 128)
                         + 8 * _pad_to(H, 128)) * itemsize
                        + (3 * _pad_to(H, 8) * 128 + 8 * 128) * 4)
    needed = stream_bytes + weight_bytes + (2 << 20)
    vmem_limit = int(min(max(needed, 32 << 20), vmem_cap))

    flops = 2 * Bp * (d_in * H + H * H + 2 * H)
    bytes_accessed = int(xT.size * itemsize + tT.size * 4 + 2 * Bp * 4
                         + (w1x.size + w2.size + wh.size) * itemsize
                         + (w1t.size + b1.size + b2.size + bh.size) * 4)

    const = lambda i: (0, 0)   # weights / biases resident across grid steps
    out = pl.pallas_call(
        cfrnet_kernel,
        out_shape=jax.ShapeDtypeStruct((2, Bp), jnp.float32),
        grid=(n_tiles,),
        in_specs=[
            pl.BlockSpec((d_in, tb), lambda i: (0, i)),   # x^T tile (lane-dense)
            pl.BlockSpec((1, tb), lambda i: (0, i)),      # t tile   (lane-dense)
            pl.BlockSpec(w1x.shape, const),
            pl.BlockSpec(w1t.shape, const),
            pl.BlockSpec(b1.shape, const),
            pl.BlockSpec(w2.shape, const),
            pl.BlockSpec(b2.shape, const),
            pl.BlockSpec(wh.shape, const),
            pl.BlockSpec(bh.shape, const),
        ],
        out_specs=pl.BlockSpec((2, tb), lambda i: (0, i)),
        compiler_params=pltpu.CompilerParams(
            dimension_semantics=("parallel",),
            vmem_limit_bytes=vmem_limit),
        cost_estimate=pl.CostEstimate(flops=flops, transcendentals=0,
                                      bytes_accessed=bytes_accessed),
    )(xT, tT, w1x_c, w1t, b1, w2_c, b2, wh_c, bh)

    mu = out[:, :B].T            # (B, 2): cheap wrapper-side layout plumbing
    return mu[:, 0:1], mu[:, 1:2]


def init_params(key, input_dim, hidden_dim):
    """Deterministic synthetic parameters (PyTorch-Linear-like uniform init).

    All weights are stored transposed (out, in) = torch layout, which is exactly
    what the batch-on-lanes kernel needs (y^T = W @ x^T + b).  W1 is pre-split
    into its x columns (H, input_dim) and its t column (H, 1) so the kernel can
    fuse the concat; mathematically identical to concat([x, t]) @ W1^T.
    """
    ks = jax.random.split(key, 8)
    d_in = input_dim + 1

    def lin(kw, kb, fan_in, fan_out):
        bound = 1.0 / jnp.sqrt(fan_in)
        w = jax.random.uniform(kw, (fan_out, fan_in), jnp.float32, -bound, bound)
        b = jax.random.uniform(kb, (fan_out, 1), jnp.float32, -bound, bound)
        return w, b

    w1, b1 = lin(ks[0], ks[1], d_in, hidden_dim)           # encoder layer 1
    w2, b2 = lin(ks[2], ks[3], hidden_dim, hidden_dim)     # encoder layer 2
    w_mu0, b_mu0 = lin(ks[4], ks[5], hidden_dim, 1)        # mu0 head
    w_mu1, b_mu1 = lin(ks[6], ks[7], hidden_dim, 1)        # mu1 head

    w1x = w1[:, :input_dim]                                # (H, input_dim)
    w1t = w1[:, input_dim:]                                # (H, 1) — the "t" column
    wh = jnp.concatenate([w_mu0, w_mu1], axis=0)           # (2, H)
    bh = jnp.concatenate([b_mu0, b_mu1], axis=0)           # (2, 1)
    return (w1x, w1t, b1, w2, b2, wh, bh)


def reference_forward(x, t, params):
    """Pure-JAX f32 reference mirroring the PyTorch module exactly."""
    w1x, w1t, b1, w2, b2, wh, bh = params
    h = jnp.maximum(x @ w1x.T + t[:, None] * w1t.T + b1.T, 0.0)  # == cat([x,t]) @ W1^T + b1
    h = jnp.maximum(h @ w2.T + b2.T, 0.0)
    mu = h @ wh.T + bh.T
    return mu[:, 0:1], mu[:, 1:2]


if __name__ == "__main__":
    # Small shapes; B deliberately NOT a multiple of 128 so the padded,
    # multi-step grid path is exercised (tile_b=128 -> 3 grid steps).
    B, INPUT_DIM, HIDDEN = 300, 4, 32

    key = jax.random.PRNGKey(0)
    kx, kt, kp = jax.random.split(key, 3)
    x = jax.random.normal(kx, (B, INPUT_DIM), dtype=jnp.float32)
    t = (jax.random.uniform(kt, (B,)) > 0.5).astype(jnp.float32)  # treatment flag

    params = init_params(kp, INPUT_DIM, HIDDEN)
    mu0_ref, mu1_ref = reference_forward(x, t, params)

    # f32 path (exact parity with the reference; also the v5e elementwise path).
    mu0, mu1 = cfrnet_forward(x, t, params, tile_b=128, compute_dtype=jnp.float32)
    jax.block_until_ready((mu0, mu1))
    assert mu0.shape == (B, 1) and mu1.shape == (B, 1)
    assert jnp.allclose(mu0, mu0_ref, atol=1e-5, rtol=1e-5)
    assert jnp.allclose(mu1, mu1_ref, atol=1e-5, rtol=1e-5)

    # bf16 MXU path (v6e/v7x): halves HBM traffic for x and the matmul weights.
    mu0b, mu1b = cfrnet_forward(x, t, params, tile_b=4096,
                                compute_dtype=jnp.bfloat16)
    jax.block_until_ready((mu0b, mu1b))
    assert jnp.allclose(mu0b, mu0_ref, atol=5e-2, rtol=5e-2)
    assert jnp.allclose(mu1b, mu1_ref, atol=5e-2, rtol=5e-2)

    print("KERNEL_OK")
</pallas_src>

<mosaic_0001>
module attributes {stable_mosaic.version = 11 : i64} {
  func.func @cfrnet_kernel(%arg0: i32, %arg1: memref<4x128xf32, #tpu.memory_space<vmem>>, %arg2: memref<1x128xf32, #tpu.memory_space<vmem>>, %arg3: memref<32x4xf32, #tpu.memory_space<vmem>>, %arg4: memref<32x1xf32, #tpu.memory_space<vmem>>, %arg5: memref<32x1xf32, #tpu.memory_space<vmem>>, %arg6: memref<32x32xf32, #tpu.memory_space<vmem>>, %arg7: memref<32x1xf32, #tpu.memory_space<vmem>>, %arg8: memref<2x32xf32, #tpu.memory_space<vmem>>, %arg9: memref<2x1xf32, #tpu.memory_space<vmem>>, %arg10: memref<2x128xf32, #tpu.memory_space<vmem>>) attributes {dimension_semantics = [#tpu.dimension_semantics<parallel>], iteration_bounds = array<i64: 3>, scalar_prefetch = 0 : i64, scratch_operands = 0 : i64, tpu.core_type = #tpu.core_type<tc>, window_params = [{transform_indices = @transform_0, window_bounds = array<i64: 4, 128>}, {transform_indices = @transform_1, window_bounds = array<i64: 1, 128>}, {pipeline_mode = #tpu.pipeline_mode<synchronous>, transform_indices = @transform_2, window_bounds = array<i64: 32, 4>}, {pipeline_mode = #tpu.pipeline_mode<synchronous>, transform_indices = @transform_3, window_bounds = array<i64: 32, 1>}, {pipeline_mode = #tpu.pipeline_mode<synchronous>, transform_indices = @transform_4, window_bounds = array<i64: 32, 1>}, {pipeline_mode = #tpu.pipeline_mode<synchronous>, transform_indices = @transform_5, window_bounds = array<i64: 32, 32>}, {pipeline_mode = #tpu.pipeline_mode<synchronous>, transform_indices = @transform_6, window_bounds = array<i64: 32, 1>}, {pipeline_mode = #tpu.pipeline_mode<synchronous>, transform_indices = @transform_7, window_bounds = array<i64: 2, 32>}, {pipeline_mode = #tpu.pipeline_mode<synchronous>, transform_indices = @transform_8, window_bounds = array<i64: 2, 1>}, {transform_indices = @transform_9, window_bounds = array<i64: 2, 128>}]} {
    %c0 = arith.constant 0 : index
    %c0_0 = arith.constant 0 : index
    %0 = vector.load %arg3[%c0, %c0_0] : memref<32x4xf32, #tpu.memory_space<vmem>>, vector<32x4xf32>
    %c0_1 = arith.constant 0 : index
    %c0_2 = arith.constant 0 : index
    %1 = vector.load %arg1[%c0_1, %c0_2] : memref<4x128xf32, #tpu.memory_space<vmem>>, vector<4x128xf32>
    %cst = arith.constant dense<0.000000e+00> : vector<32x128xf32>
    %2 = tpu.matmul %0, %1, %cst {dimension_numbers = #tpu.dot_dimension_numbers<[1], [0], [0], [1], [0, 0, 1, 1], [], []>} : vector<32x4xf32>, vector<4x128xf32>, vector<32x128xf32> -> vector<32x128xf32>
    %c0_3 = arith.constant 0 : index
    %c0_4 = arith.constant 0 : index
    %3 = vector.load %arg4[%c0_3, %c0_4] : memref<32x1xf32, #tpu.memory_space<vmem>>, vector<32x1xf32>
    %c0_5 = arith.constant 0 : index
    %c0_6 = arith.constant 0 : index
    %4 = vector.load %arg2[%c0_5, %c0_6] : memref<1x128xf32, #tpu.memory_space<vmem>>, vector<1x128xf32>
    %5 = vector.broadcast %3 : vector<32x1xf32> to vector<32x128xf32>
    %6 = vector.broadcast %4 : vector<1x128xf32> to vector<32x128xf32>
    %7 = arith.mulf %5, %6 : vector<32x128xf32>
    %8 = arith.addf %2, %7 : vector<32x128xf32>
    %c0_7 = arith.constant 0 : index
    %c0_8 = arith.constant 0 : index
    %9 = vector.load %arg5[%c0_7, %c0_8] : memref<32x1xf32, #tpu.memory_space<vmem>>, vector<32x1xf32>
    %10 = vector.broadcast %9 : vector<32x1xf32> to vector<32x128xf32>
    %11 = arith.addf %8, %10 : vector<32x128xf32>
    %cst_9 = arith.constant 0.000000e+00 : f32
    %12 = vector.broadcast %cst_9 : f32 to vector<32x128xf32>
    %13 = arith.maximumf %11, %12 : vector<32x128xf32>
    %c0_10 = arith.constant 0 : index
    %c0_11 = arith.constant 0 : index
    %14 = vector.load %arg6[%c0_10, %c0_11] : memref<32x32xf32, #tpu.memory_space<vmem>>, vector<32x32xf32>
    %cst_12 = arith.constant dense<0.000000e+00> : vector<32x128xf32>
    %15 = tpu.matmul %14, %13, %cst_12 {dimension_numbers = #tpu.dot_dimension_numbers<[1], [0], [0], [1], [0, 0, 1, 1], [], []>} : vector<32x32xf32>, vector<32x128xf32>, vector<32x128xf32> -> vector<32x128xf32>
    %c0_13 = arith.constant 0 : index
    %c0_14 = arith.constant 0 : index
    %16 = vector.load %arg7[%c0_13, %c0_14] : memref<32x1xf32, #tpu.memory_space<vmem>>, vector<32x1xf32>
    %17 = vector.broadcast %16 : vector<32x1xf32> to vector<32x128xf32>
    %18 = arith.addf %15, %17 : vector<32x128xf32>
    %cst_15 = arith.constant 0.000000e+00 : f32
    %19 = vector.broadcast %cst_15 : f32 to vector<32x128xf32>
    %20 = arith.maximumf %18, %19 : vector<32x128xf32>
    %c0_16 = arith.constant 0 : index
    %c0_17 = arith.constant 0 : index
    %21 = vector.load %arg8[%c0_16, %c0_17] : memref<2x32xf32, #tpu.memory_space<vmem>>, vector<2x32xf32>
    %cst_18 = arith.constant dense<0.000000e+00> : vector<2x128xf32>
    %22 = tpu.matmul %21, %20, %cst_18 {dimension_numbers = #tpu.dot_dimension_numbers<[1], [0], [0], [1], [0, 0, 1, 1], [], []>} : vector<2x32xf32>, vector<32x128xf32>, vector<2x128xf32> -> vector<2x128xf32>
    %c0_19 = arith.constant 0 : index
    %c0_20 = arith.constant 0 : index
    %23 = vector.load %arg9[%c0_19, %c0_20] : memref<2x1xf32, #tpu.memory_space<vmem>>, vector<2x1xf32>
    %24 = vector.broadcast %23 : vector<2x1xf32> to vector<2x128xf32>
    %25 = arith.addf %22, %24 : vector<2x128xf32>
    %c0_21 = arith.constant 0 : index
    %c0_22 = arith.constant 0 : index
    %26 = vector.load %arg10[%c0_21, %c0_22] : memref<2x128xf32, #tpu.memory_space<vmem>>, vector<2x128xf32>
    tpu.vector_store %arg10[%c0_21, %c0_22], %25 {strides = array<i32>} : memref<2x128xf32, #tpu.memory_space<vmem>>, vector<2x128xf32>,
    return
  }
  func.func @transform_0(%arg0: i32) -> (i32, i32) {
    %c0_i32 = arith.constant 0 : i32
    %c0_i32_0 = arith.constant 0 : i32
    return %c0_i32, %arg0 : i32, i32
  }
  func.func @transform_1(%arg0: i32) -> (i32, i32) {
    %c0_i32 = arith.constant 0 : i32
    %c0_i32_0 = arith.constant 0 : i32
    return %c0_i32, %arg0 : i32, i32
  }
  func.func @transform_2(%arg0: i32) -> (i32, i32) {
    %c0_i32 = arith.constant 0 : i32
    %c0_i32_0 = arith.constant 0 : i32
    %c0_i32_1 = arith.constant 0 : i32
    return %c0_i32, %c0_i32_0 : i32, i32
  }
  func.func @transform_3(%arg0: i32) -> (i32, i32) {
    %c0_i32 = arith.constant 0 : i32
    %c0_i32_0 = arith.constant 0 : i32
    %c0_i32_1 = arith.constant 0 : i32
    return %c0_i32, %c0_i32_0 : i32, i32
  }
  func.func @transform_4(%arg0: i32) -> (i32, i32) {
    %c0_i32 = arith.constant 0 : i32
    %c0_i32_0 = arith.constant 0 : i32
    %c0_i32_1 = arith.constant 0 : i32
    return %c0_i32, %c0_i32_0 : i32, i32
  }
  func.func @transform_5(%arg0: i32) -> (i32, i32) {
    %c0_i32 = arith.constant 0 : i32
    %c0_i32_0 = arith.constant 0 : i32
    %c0_i32_1 = arith.constant 0 : i32
    return %c0_i32, %c0_i32_0 : i32, i32
  }
  func.func @transform_6(%arg0: i32) -> (i32, i32) {
    %c0_i32 = arith.constant 0 : i32
    %c0_i32_0 = arith.constant 0 : i32
    %c0_i32_1 = arith.constant 0 : i32
    return %c0_i32, %c0_i32_0 : i32, i32
  }
  func.func @transform_7(%arg0: i32) -> (i32, i32) {
    %c0_i32 = arith.constant 0 : i32
    %c0_i32_0 = arith.constant 0 : i32
    %c0_i32_1 = arith.constant 0 : i32
    return %c0_i32, %c0_i32_0 : i32, i32
  }
  func.func @transform_8(%arg0: i32) -> (i32, i32) {
    %c0_i32 = arith.constant 0 : i32
    %c0_i32_0 = arith.constant 0 : i32
    %c0_i32_1 = arith.constant 0 : i32
    return %c0_i32, %c0_i32_0 : i32, i32
  }
  func.func @transform_9(%arg0: i32) -> (i32, i32) {
    %c0_i32 = arith.constant 0 : i32
    %c0_i32_0 = arith.constant 0 : i32
    return %c0_i32, %arg0 : i32, i32
  }
}

</mosaic_0001>

<llo_original>
// kernel: tpu_custom_call.1
$region0: #{tpu_custom_call.1}
  #allocation0 [shape = 'u32[]', space=smem, size = 0x4, offset = 0x4, fixed_abs, tag = 'smem constant byte address 0x4 - core index']
  #allocation1 [shape = 'u32[72,128]{1,0:T(1,128)}', space=vmem, size = 0x9000, scoped, tag = 'internal scratch']
  %s0 = inlined_call_operand.vmem [shape: f32[4,384], index: 0, kind: input, shape index: {}]
  %s1 = inlined_call_operand.vmem [shape: f32[1,384], index: 1, kind: input, shape index: {}]
  %s2 = inlined_call_operand.vmem [shape: f32[32,4], index: 2, kind: input, shape index: {}]
  %s3 = inlined_call_operand.vmem [shape: f32[32,1], index: 3, kind: input, shape index: {}]
  %s4 = inlined_call_operand.vmem [shape: f32[32,1], index: 4, kind: input, shape index: {}]
  %s5 = inlined_call_operand.vmem [shape: f32[32,32], index: 5, kind: input, shape index: {}]
  %s6 = inlined_call_operand.vmem [shape: f32[32,1], index: 6, kind: input, shape index: {}]
  %s7 = inlined_call_operand.vmem [shape: f32[2,32], index: 7, kind: input, shape index: {}]
  %s8 = inlined_call_operand.vmem [shape: f32[2,1], index: 8, kind: input, shape index: {}]
  %s9 = inlined_call_operand.hbm [shape: f32[2,384], index: 9, kind: output, shape index: {}]
  %s10 = sld [smem:[#allocation0]]
  $region69: #{tpu_custom_call.1} parent=0
    _
  %s12 = ssub.s32 1, %s10
  %s13 = scalar_select 0, %s12, %s10
  $region1: #{tpu_custom_call.1} parent=0
    #allocation2 [shape = 'u8[2048]{0}', space=vmem, size = 0x800, scoped, tag = 'output window, operand 0']
    #allocation3 [shape = 's32[2]{0}', space=sflag, size = 0x8, scoped, tag = 'scoped memory for tpu_custom_call.1']
    %14 = vsyncpa [#allocation3], 0
    %s15 = scalar_lea.sflag [#allocation3], 1
    %16 = vsyncpa %s15, 0
    loop: start=0, step=1, limit=5
    $region2: #{tpu_custom_call.1} parent=1 // loop_pre_header
      _
    $region3: #{tpu_custom_call.1} parent=1 // loop_header
      %s18 = sphi 0, %s22
      %p19 = scmp.ge.s32.totalorder %s18, 5
      %s28 = sphi 0, %s30
      %s31 = sphi 0, %s28
      %s32 = sphi 0, %s31
      %s48 = sphi 0, %s32
      %s54 = sphi 0, %s56
      %s57 = sphi 0, %s54
      %s58 = sphi 0, %s57
      %s74 = sphi 0, %s58
      %s78 = sphi 0, %s78
      %s80 = sphi 0, %s78
      %s81 = sphi 0, %s80
      %s95 = sphi 0, %s81
      %s99 = sphi 0, %s99
      %s101 = sphi 0, %s99
      %s102 = sphi 0, %s101
      %s116 = sphi 0, %s102
      %s120 = sphi 0, %s120
      %s122 = sphi 0, %s120
      %s123 = sphi 0, %s122
      %s137 = sphi 0, %s123
      %s141 = sphi 0, %s141
      %s143 = sphi 0, %s141
      %s144 = sphi 0, %s143
      %s158 = sphi 0, %s144
      %s162 = sphi 0, %s162
      %s164 = sphi 0, %s162
      %s165 = sphi 0, %s164
      %s179 = sphi 0, %s165
      %s183 = sphi 0, %s183
      %s185 = sphi 0, %s183
      %s186 = sphi 0, %s185
      %s200 = sphi 0, %s186
      %s204 = sphi 0, %s204
      %s206 = sphi 0, %s204
      %s207 = sphi 0, %s206
      %s221 = sphi 0, %s207
      %s227 = sphi 0, %s229
      %s230 = sphi 0, %s227
      %s231 = sphi 0, %s230
      %s247 = sphi 0, %s231
    $region4: #{tpu_custom_call.1} parent=1 // loop_header_branch
      %21 = sbr.rel (%p19) target = $region8
    $region5: #{tpu_custom_call.1} parent=1 // loop_body
      %s23 = ssub.s32 %s18, 1
      %s24 = ssub.s32 %s18, 2
      %s25 = sadd.s32 %s18, 1
      %s26 = ssub.s32 %s18, %s25
      %p27 = scmp.eq.s32.totalorder %s26, 0
      %s29 = sadd.s32 %s28, 1
      %s30 = scalar_select %p27, %s28, %s29
      %p33 = pneg %p27
      %p34 = scmp.eq.s32.totalorder %s18, 2
      %p35 = por %p33, %p34
      %p36 = scmp.ne.s32.totalorder %s28, %s31
      %p37 = scmp.eq.s32.totalorder %s18, 0
      %p38 = por %p36, %p37
      %p39 = scmp.ne.s32.totalorder %s28, %s31
      %p40 = scmp.eq.s32.totalorder %s23, 2
      %p41 = por %p39, %p40
      %p42 = scmp.ne.s32.totalorder %s31, %s32
      %p43 = scmp.eq.s32.totalorder %s23, 0
      %p44 = por %p42, %p43
      %p45 = scmp.ne.s32.totalorder %s31, %s32
      %p46 = scmp.eq.s32.totalorder %s24, 2
      %p47 = por %p45, %p46
      %p49 = scmp.ne.s32.totalorder %s32, %s48
      %p50 = scmp.eq.s32.totalorder %s24, 0
      %p51 = por %p49, %p50
      %s52 = ssub.s32 %s18, %s25
      %p53 = scmp.eq.s32.totalorder %s52, 0
      %s55 = sadd.s32 %s54, 1
      %s56 = scalar_select %p53, %s54, %s55
      %p59 = pneg %p53
      %p60 = scmp.eq.s32.totalorder %s18, 2
      %p61 = por %p59, %p60
      %p62 = scmp.ne.s32.totalorder %s54, %s57
      %p63 = scmp.eq.s32.totalorder %s18, 0
      %p64 = por %p62, %p63
      %p65 = scmp.ne.s32.totalorder %s54, %s57
      %p66 = scmp.eq.s32.totalorder %s23, 2
      %p67 = por %p65, %p66
      %p68 = scmp.ne.s32.totalorder %s57, %s58
      %p69 = scmp.eq.s32.totalorder %s23, 0
      %p70 = por %p68, %p69
      %p71 = scmp.ne.s32.totalorder %s57, %s58
      %p72 = scmp.eq.s32.totalorder %s24, 2
      %p73 = por %p71, %p72
      %p75 = scmp.ne.s32.totalorder %s58, %s74
      %p76 = scmp.eq.s32.totalorder %s24, 0
      %p77 = por %p75, %p76
      %s79 = sadd.s32 %s78, 1
      %p82 = scmp.eq.s32.totalorder %s18, 2
      %p83 = scmp.ne.s32.totalorder %s78, %s80
      %p84 = scmp.eq.s32.totalorder %s18, 0
      %p85 = por %p83, %p84
      %p86 = scmp.ne.s32.totalorder %s78, %s80
      %p87 = scmp.eq.s32.totalorder %s23, 2
      %p88 = por %p86, %p87
      %p89 = scmp.ne.s32.totalorder %s80, %s81
      %p90 = scmp.eq.s32.totalorder %s23, 0
      %p91 = por %p89, %p90
      %p92 = scmp.ne.s32.totalorder %s80, %s81
      %p93 = scmp.eq.s32.totalorder %s24, 2
      %p94 = por %p92, %p93
      %p96 = scmp.ne.s32.totalorder %s81, %s95
      %p97 = scmp.eq.s32.totalorder %s24, 0
      %p98 = por %p96, %p97
      %s100 = sadd.s32 %s99, 1
      %p103 = scmp.eq.s32.totalorder %s18, 2
      %p104 = scmp.ne.s32.totalorder %s99, %s101
      %p105 = scmp.eq.s32.totalorder %s18, 0
      %p106 = por %p104, %p105
      %p107 = scmp.ne.s32.totalorder %s99, %s101
      %p108 = scmp.eq.s32.totalorder %s23, 2
      %p109 = por %p107, %p108
      %p110 = scmp.ne.s32.totalorder %s101, %s102
      %p111 = scmp.eq.s32.totalorder %s23, 0
      %p112 = por %p110, %p111
      %p113 = scmp.ne.s32.totalorder %s101, %s102
      %p114 = scmp.eq.s32.totalorder %s24, 2
      %p115 = por %p113, %p114
      %p117 = scmp.ne.s32.totalorder %s102, %s116
      %p118 = scmp.eq.s32.totalorder %s24, 0
      %p119 = por %p117, %p118
      %s121 = sadd.s32 %s120, 1
      %p124 = scmp.eq.s32.totalorder %s18, 2
      %p125 = scmp.ne.s32.totalorder %s120, %s122
      %p126 = scmp.eq.s32.totalorder %s18, 0
      %p127 = por %p125, %p126
      %p128 = scmp.ne.s32.totalorder %s120, %s122
      %p129 = scmp.eq.s32.totalorder %s23, 2
      %p130 = por %p128, %p129
      %p131 = scmp.ne.s32.totalorder %s122, %s123
      %p132 = scmp.eq.s32.totalorder %s23, 0
      %p133 = por %p131, %p132
      %p134 = scmp.ne.s32.totalorder %s122, %s123
      %p135 = scmp.eq.s32.totalorder %s24, 2
      %p136 = por %p134, %p135
      %p138 = scmp.ne.s32.totalorder %s123, %s137
      %p139 = scmp.eq.s32.totalorder %s24, 0
      %p140 = por %p138, %p139
      %s142 = sadd.s32 %s141, 1
      %p145 = scmp.eq.s32.totalorder %s18, 2
      %p146 = scmp.ne.s32.totalorder %s141, %s143
      %p147 = scmp.eq.s32.totalorder %s18, 0
      %p148 = por %p146, %p147
      %p149 = scmp.ne.s32.totalorder %s141, %s143
      %p150 = scmp.eq.s32.totalorder %s23, 2
      %p151 = por %p149, %p150
      %p152 = scmp.ne.s32.totalorder %s143, %s144
      %p153 = scmp.eq.s32.totalorder %s23, 0
      %p154 = por %p152, %p153
      %p155 = scmp.ne.s32.totalorder %s143, %s144
      %p156 = scmp.eq.s32.totalorder %s24, 2
      %p157 = por %p155, %p156
      %p159 = scmp.ne.s32.totalorder %s144, %s158
      %p160 = scmp.eq.s32.totalorder %s24, 0
      %p161 = por %p159, %p160
      %s163 = sadd.s32 %s162, 1
      %p166 = scmp.eq.s32.totalorder %s18, 2
      %p167 = scmp.ne.s32.totalorder %s162, %s164
      %p168 = scmp.eq.s32.totalorder %s18, 0
      %p169 = por %p167, %p168
      %p170 = scmp.ne.s32.totalorder %s162, %s164
      %p171 = scmp.eq.s32.totalorder %s23, 2
      %p172 = por %p170, %p171
      %p173 = scmp.ne.s32.totalorder %s164, %s165
      %p174 = scmp.eq.s32.totalorder %s23, 0
      %p175 = por %p173, %p174
      %p176 = scmp.ne.s32.totalorder %s164, %s165
      %p177 = scmp.eq.s32.totalorder %s24, 2
      %p178 = por %p176, %p177
      %p180 = scmp.ne.s32.totalorder %s165, %s179
      %p181 = scmp.eq.s32.totalorder %s24, 0
      %p182 = por %p180, %p181
      %s184 = sadd.s32 %s183, 1
      %p187 = scmp.eq.s32.totalorder %s18, 2
      %p188 = scmp.ne.s32.totalorder %s183, %s185
      %p189 = scmp.eq.s32.totalorder %s18, 0
      %p190 = por %p188, %p189
      %p191 = scmp.ne.s32.totalorder %s183, %s185
      %p192 = scmp.eq.s32.totalorder %s23, 2
      %p193 = por %p191, %p192
      %p194 = scmp.ne.s32.totalorder %s185, %s186
      %p195 = scmp.eq.s32.totalorder %s23, 0
      %p196 = por %p194, %p195
      %p197 = scmp.ne.s32.totalorder %s185, %s186
      %p198 = scmp.eq.s32.totalorder %s24, 2
      %p199 = por %p197, %p198
      %p201 = scmp.ne.s32.totalorder %s186, %s200
      %p202 = scmp.eq.s32.totalorder %s24, 0
      %p203 = por %p201, %p202
      %s205 = sadd.s32 %s204, 1
      %p208 = scmp.eq.s32.totalorder %s18, 2
      %p209 = scmp.ne.s32.totalorder %s204, %s206
      %p210 = scmp.eq.s32.totalorder %s18, 0
      %p211 = por %p209, %p210
      %p212 = scmp.ne.s32.totalorder %s204, %s206
      %p213 = scmp.eq.s32.totalorder %s23, 2
      %p214 = por %p212, %p213
      %p215 = scmp.ne.s32.totalorder %s206, %s207
      %p216 = scmp.eq.s32.totalorder %s23, 0
      %p217 = por %p215, %p216
      %p218 = scmp.ne.s32.totalorder %s206, %s207
      %p219 = scmp.eq.s32.totalorder %s24, 2
      %p220 = por %p218, %p219
      %p222 = scmp.ne.s32.totalorder %s207, %s221
      %p223 = scmp.eq.s32.totalorder %s24, 0
      %p224 = por %p222, %p223
      %s225 = ssub.s32 %s18, %s25
      %p226 = scmp.eq.s32.totalorder %s225, 0
      %s228 = sadd.s32 %s227, 1
      %s229 = scalar_select %p226, %s227, %s228
      %p232 = pneg %p226
      %p233 = scmp.eq.s32.totalorder %s18, 2
      %p234 = por %p232, %p233
      %p235 = scmp.ne.s32.totalorder %s227, %s230
      %p236 = scmp.eq.s32.totalorder %s18, 0
      %p237 = por %p235, %p236
      %p238 = scmp.ne.s32.totalorder %s227, %s230
      %p239 = scmp.eq.s32.totalorder %s23, 2
      %p240 = por %p238, %p239
      %p241 = scmp.ne.s32.totalorder %s230, %s231
      %p242 = scmp.eq.s32.totalorder %s23, 0
      %p243 = por %p241, %p242
      %p244 = scmp.ne.s32.totalorder %s230, %s231
      %p245 = scmp.eq.s32.totalorder %s24, 2
      %p246 = por %p244, %p245
      %p248 = scmp.ne.s32.totalorder %s231, %s247
      %p249 = scmp.eq.s32.totalorder %s24, 0
      %p250 = por %p248, %p249
      %p251 = scmp.le.s32.totalorder 1, %s18
      %p252 = scmp.lt.s32.totalorder %s18, 4
      %p253 = pnand %p251, %p252
      %p254 = pneg %p253
      // Predicated region
      $region9: #{tpu_custom_call.1} parent=5 // pred_check
        _
      $region10: #{tpu_custom_call.1} parent=5 // pred_check_branch
        %256 = sbr.rel (%p253) target = $region12
      $region11: #{tpu_custom_call.1} parent=5 // pred_region
        %s257 = ssub.s32 %s18, 1
        // Predicated region
        $region13: #{tpu_custom_call.1} parent=11 // pred_check
          %p258 = pneg %p91
        $region14: #{tpu_custom_call.1} parent=11 // pred_check_branch
          %260 = sbr.rel (%p258) target = $region16
        $region15: #{tpu_custom_call.1} parent=11 // pred_region
          _
        $region16: #{tpu_custom_call.1} parent=11 // pred_fallthru
          _
        // Predicated region
        $region17: #{tpu_custom_call.1} parent=11 // pred_check
          %p261 = pneg %p112
        $region18: #{tpu_custom_call.1} parent=11 // pred_check_branch
          %263 = sbr.rel (%p261) target = $region20
        $region19: #{tpu_custom_call.1} parent=11 // pred_region
          _
        $region20: #{tpu_custom_call.1} parent=11 // pred_fallthru
          _
        // Predicated region
        $region21: #{tpu_custom_call.1} parent=11 // pred_check
          %p264 = pneg %p133
        $region22: #{tpu_custom_call.1} parent=11 // pred_check_branch
          %266 = sbr.rel (%p264) target = $region24
        $region23: #{tpu_custom_call.1} parent=11 // pred_region
          _
        $region24: #{tpu_custom_call.1} parent=11 // pred_fallthru
          _
        // Predicated region
        $region25: #{tpu_custom_call.1} parent=11 // pred_check
          %p267 = pneg %p154
        $region26: #{tpu_custom_call.1} parent=11 // pred_check_branch
          %269 = sbr.rel (%p267) target = $region28
        $region27: #{tpu_custom_call.1} parent=11 // pred_region
          _
        $region28: #{tpu_custom_call.1} parent=11 // pred_fallthru
          _
        // Predicated region
        $region29: #{tpu_custom_call.1} parent=11 // pred_check
          %p270 = pneg %p175
        $region30: #{tpu_custom_call.1} parent=11 // pred_check_branch
          %272 = sbr.rel (%p270) target = $region32
        $region31: #{tpu_custom_call.1} parent=11 // pred_region
          _
        $region32: #{tpu_custom_call.1} parent=11 // pred_fallthru
          _
        // Predicated region
        $region33: #{tpu_custom_call.1} parent=11 // pred_check
          %p273 = pneg %p196
        $region34: #{tpu_custom_call.1} parent=11 // pred_check_branch
          %275 = sbr.rel (%p273) target = $region36
        $region35: #{tpu_custom_call.1} parent=11 // pred_region
          _
        $region36: #{tpu_custom_call.1} parent=11 // pred_fallthru
          _
        // Predicated region
        $region37: #{tpu_custom_call.1} parent=11 // pred_check
          %p276 = pneg %p217
        $region38: #{tpu_custom_call.1} parent=11 // pred_check_branch
          %278 = sbr.rel (%p276) target = $region40
        $region39: #{tpu_custom_call.1} parent=11 // pred_region
          _
        $region40: #{tpu_custom_call.1} parent=11 // pred_fallthru
          _
      $region12: #{tpu_custom_call.1} parent=5 // pred_fallthru
        _
      %p279 = scmp.lt.s32.totalorder %s18, 3
      // Predicated region
      $region41: #{tpu_custom_call.1} parent=5 // pred_check
        %p280 = pneg %p279
      $region42: #{tpu_custom_call.1} parent=5 // pred_check_branch
        %282 = sbr.rel (%p280) target = $region44
      $region43: #{tpu_custom_call.1} parent=5 // pred_region
        // Predicated region
        $region45: #{tpu_custom_call.1} parent=43 // pred_check
          %p283 = pneg %p38
        $region46: #{tpu_custom_call.1} parent=43 // pred_check_branch
          %285 = sbr.rel (%p283) target = $region48
        $region47: #{tpu_custom_call.1} parent=43 // pred_region
          %p286 = scmp.lt.s32.totalorder %s18, 2
          %s287 = scalar_select %p286, %s18, 2
          %s288 = smul.addr %s287, 4
          %s289 = scalar_lea.vmem %s0, %s288
        $region48: #{tpu_custom_call.1} parent=43 // pred_fallthru
          _
        // Predicated region
        $region49: #{tpu_custom_call.1} parent=43 // pred_check
          %p290 = pneg %p64
        $region50: #{tpu_custom_call.1} parent=43 // pred_check_branch
          %292 = sbr.rel (%p290) target = $region52
        $region51: #{tpu_custom_call.1} parent=43 // pred_region
          %p293 = scmp.lt.s32.totalorder %s18, 2
          %s294 = scalar_select %p293, %s18, 2
          %s295 = scalar_lea.vmem %s1, %s294
        $region52: #{tpu_custom_call.1} parent=43 // pred_fallthru
          _
      $region44: #{tpu_custom_call.1} parent=5 // pred_fallthru
        _
      %p296 = scmp.le.s32.totalorder 1, %s18
      %p297 = scmp.lt.s32.totalorder %s18, 4
      %p298 = pnand %p296, %p297
      %p299 = pneg %p298
      // Predicated region
      $region53: #{tpu_custom_call.1} parent=5 // pred_check
        _
      $region54: #{tpu_custom_call.1} parent=5 // pred_check_branch
        %301 = sbr.rel (%p298) target = $region56
      $region55: #{tpu_custom_call.1} parent=5 // pred_region
        %s302 = ssub.s32 %s18, 1
        %p303 = scmp.lt.s32.totalorder %s23, 2
        %s304 = scalar_select %p303, %s23, 2
        %s305 = smul.addr %s304, 4
        %s306 = scalar_lea.vmem %s0, %s305
        %p307 = pneg %p44
        %p308 = pneg %p41
        %p309 = scmp.lt.s32.totalorder %s23, 2
        %s310 = scalar_select %p309, %s23, 2
        %s311 = scalar_lea.vmem %s1, %s310
        %p312 = pneg %p70
        %p313 = pneg %p67
        %p314 = pneg %p91
        %p315 = pneg %p88
        %p316 = pneg %p112
        %p317 = pneg %p109
        %p318 = pneg %p133
        %p319 = pneg %p130
        %p320 = pneg %p154
        %p321 = pneg %p151
        %p322 = pneg %p175
        %p323 = pneg %p172
        %p324 = pneg %p196
        %p325 = pneg %p193
        %p326 = pneg %p217
        %p327 = pneg %p214
        %p328 = pneg %p243
        %p329 = pneg %p240
        %s330 = sand.u32 %s230, 1
        %s331 = scalar_lea.sflag [#allocation3], %s330
        %s332 = sand.u32 %s230, 1
        %s333 = smul.addr %s332, 2
        %s334 = scalar_lea.vmem [#allocation2], %s333
        %p335 = scmp.lt.s32.totalorder %s23, 2
        %s336 = scalar_select %p335, %s23, 2
        %s337 = smul.addr %s336, 4
        %s338 = scalar_lea.vmem %s0, %s337
        %p339 = scmp.lt.s32.totalorder %s23, 2
        %s340 = scalar_select %p339, %s23, 2
        %s341 = scalar_lea.vmem %s1, %s340
        %v342 = vld [vmem:[%s2] sm:$0xff]
        %v343 = vld [vmem:[%s2 + $0x8] sm:$0xff]
        %v344 = vld [vmem:[%s2 + $0x10] sm:$0xff]
        %v345 = vld [vmem:[%s2 + $0x18] sm:$0xff]
        %v346 = vld [vmem:[%s338] sm:$0xf]
        %v347 = vld [vmem:[%s3] sm:$0xff]
        %v348 = vld [vmem:[%s3 + $0x8] sm:$0xff]
        %v349 = vld [vmem:[%s3 + $0x10] sm:$0xff]
        %v350 = vld [vmem:[%s3 + $0x18] sm:$0xff]
        %v351 = vld [vmem:[%s341] sm:$0x1]
        %353 = vset.pattern.permute.xlu0 0
        %354 = vperm.xlu0 %353, %v347
        %v355 = vpop.permute.xlu0 %354
        %358 = vset.pattern.permute.xlu0 0
        %359 = vperm.xlu0 %358, %v348
        %v360 = vpop.permute.xlu0 %359
        %363 = vset.pattern.permute.xlu0 0
        %364 = vperm.xlu0 %363, %v349
        %v365 = vpop.permute.xlu0 %364
        %368 = vset.pattern.permute.xlu0 0
        %369 = vperm.xlu0 %368, %v350
        %v370 = vpop.permute.xlu0 %369
        %v373 = vperm.slane %v351, 0
        %v375 = vmul.f32 %v355, %v373
        %v376 = vmul.f32 %v360, %v373
        %v377 = vmul.f32 %v365, %v373
        %v378 = vmul.f32 %v370, %v373
        %vm379 = vcmask 31744
        %v381 = vsel %vm379, %v342, 0
        %v384 = vsel %vm379, %v343, 0
        %v387 = vsel %vm379, %v344, 0
        %v390 = vsel %vm379, %v345, 0
        %vm392 = vcmask 1043456
        %v394 = vsel %vm392, %v346, 0
        %396 = vmatpush.msra.mxu0 0.0
        %397 = vmatpush.msra.mxu0 0.0
        %398 = vmatpush.msra.mxu0 0.0
        %399 = vmatpush.msra.mxu0 0.0
        %400 = vmatpush.msra.mxu0 0.0
        %401 = vmatpush.msra.mxu0 0.0
        %402 = vmatpush.msra.mxu0 0.0
        %403 = vmatpush.msra.mxu0 0.0
        %404 = vmatpush.msra.mxu0 0.0
        %405 = vmatpush.msra.mxu0 0.0
        %406 = vmatpush.msra.mxu0 0.0
        %407 = vmatpush.msra.mxu0 0.0
        %408 = vmatpush.msra.mxu0 0.0
        %409 = vmatpush.msra.mxu0 0.0
        %410 = vmatpush.msra.mxu0 0.0
        %411 = vmatpush.msra.mxu0 %v394
        %412 = vmatmul.f32.gmra.mxu0 %v381
        %v413 = vpop.f32.mrf.mxu0
        %v414 = vadd.f32 %v375, %v413
        %415 = vmatmul.f32.gmra.mxu0 %v384
        %v416 = vpop.f32.mrf.mxu0
        %v417 = vadd.f32 %v376, %v416
        %418 = vmatmul.f32.gmra.mxu0 %v387
        %v419 = vpop.f32.mrf.mxu0
        %v420 = vadd.f32 %v377, %v419
        %421 = vmatmul.f32.gmra.mxu0 %v390
        %v422 = vpop.f32.mrf.mxu0
        %v423 = vadd.f32 %v378, %v422
        %424 = vdwg.mxu0
        %v425 = vld [vmem:[%s4] sm:$0xff]
        %v426 = vld [vmem:[%s4 + $0x8] sm:$0xff]
        %v427 = vld [vmem:[%s4 + $0x10] sm:$0xff]
        %v428 = vld [vmem:[%s4 + $0x18] sm:$0xff]
        %430 = vset.pattern.permute.xlu0 0
        %431 = vperm.xlu0 %430, %v425
        %v432 = vpop.permute.xlu0 %431
        %435 = vset.pattern.permute.xlu0 0
        %436 = vperm.xlu0 %435, %v426
        %v437 = vpop.permute.xlu0 %436
        %440 = vset.pattern.permute.xlu0 0
        %441 = vperm.xlu0 %440, %v427
        %v442 = vpop.permute.xlu0 %441
        %445 = vset.pattern.permute.xlu0 0
        %446 = vperm.xlu0 %445, %v428
        %v447 = vpop.permute.xlu0 %446
        %v449 = vadd.f32 %v414, %v432
        %v450 = vadd.f32 %v417, %v437
        %v451 = vadd.f32 %v420, %v442
        %v452 = vadd.f32 %v423, %v447
        %v453 = vmax.f32 %v449, 0.0
        %v454 = vmax.f32 %v450, 0.0
        %v455 = vmax.f32 %v451, 0.0
        %v456 = vmax.f32 %v452, 0.0
        %v457 = vld [vmem:[%s5] sm:$0xff]
        %v458 = vld [vmem:[%s5 + $0x8] sm:$0xff]
        %v459 = vld [vmem:[%s5 + $0x10] sm:$0xff]
        %v460 = vld [vmem:[%s5 + $0x18] sm:$0xff]
        %v461 = vld [vmem:[%s6] sm:$0xff]
        %v462 = vld [vmem:[%s6 + $0x8] sm:$0xff]
        %v463 = vld [vmem:[%s6 + $0x10] sm:$0xff]
        %v464 = vld [vmem:[%s6 + $0x18] sm:$0xff]
        %466 = vset.pattern.permute.xlu0 0
        %467 = vperm.xlu0 %466, %v461
        %v468 = vpop.permute.xlu0 %467
        %471 = vset.pattern.permute.xlu0 0
        %472 = vperm.xlu0 %471, %v462
        %v473 = vpop.permute.xlu0 %472
        %476 = vset.pattern.permute.xlu0 0
        %477 = vperm.xlu0 %476, %v463
        %v478 = vpop.permute.xlu0 %477
        %481 = vset.pattern.permute.xlu0 0
        %482 = vperm.xlu0 %481, %v464
        %v483 = vpop.permute.xlu0 %482
        %vm485 = vcmask 261120
        %v487 = vsel %vm485, %v457, 0
        %v490 = vsel %vm485, %v458, 0
        %v493 = vsel %vm485, %v459, 0
        %v496 = vsel %vm485, %v460, 0
        %498 = vmatpush.msra.mxu0 0.0
        %499 = vmatpush.msra.mxu0 0.0
        %500 = vmatpush.msra.mxu0 0.0
        %501 = vmatpush.msra.mxu0 0.0
        %502 = vmatpush.msra.mxu0 0.0
        %503 = vmatpush.msra.mxu0 0.0
        %504 = vmatpush.msra.mxu0 0.0
        %505 = vmatpush.msra.mxu0 0.0
        %506 = vmatpush.msra.mxu0 0.0
        %507 = vmatpush.msra.mxu0 0.0
        %508 = vmatpush.msra.mxu0 0.0
        %509 = vmatpush.msra.mxu0 0.0
        %510 = vmatpush.msra.mxu0 %v456
        %511 = vmatpush.msra.mxu0 %v455
        %512 = vmatpush.msra.mxu0 %v454
        %513 = vmatpush.msra.mxu0 %v453
        %514 = vmatmul.f32.gmra.mxu0 %v487
        %v515 = vpop.f32.mrf.mxu0
        %v516 = vadd.f32 %v468, %v515
        %517 = vmatmul.f32.gmra.mxu0 %v490
        %v518 = vpop.f32.mrf.mxu0
        %v519 = vadd.f32 %v473, %v518
        %520 = vmatmul.f32.gmra.mxu0 %v493
        %v521 = vpop.f32.mrf.mxu0
        %v522 = vadd.f32 %v478, %v521
        %523 = vmatmul.f32.gmra.mxu0 %v496
        %v524 = vpop.f32.mrf.mxu0
        %v525 = vadd.f32 %v483, %v524
        %526 = vdwg.mxu0
        %v527 = vmax.f32 %v516, 0.0
        %v528 = vmax.f32 %v519, 0.0
        %v529 = vmax.f32 %v522, 0.0
        %v530 = vmax.f32 %v525, 0.0
        %v531 = vld [vmem:[%s7] sm:$0x3]
        %v532 = vld [vmem:[%s8] sm:$0x3]
        %534 = vset.pattern.permute.xlu0 0
        %535 = vperm.xlu0 %534, %v532
        %v536 = vpop.permute.xlu0 %535
        %v539 = vsel %vm485, %v531, 0
        %541 = vmatpush.msra.mxu0 0.0
        %542 = vmatpush.msra.mxu0 0.0
        %543 = vmatpush.msra.mxu0 0.0
        %544 = vmatpush.msra.mxu0 0.0
        %545 = vmatpush.msra.mxu0 0.0
        %546 = vmatpush.msra.mxu0 0.0
        %547 = vmatpush.msra.mxu0 0.0
        %548 = vmatpush.msra.mxu0 0.0
        %549 = vmatpush.msra.mxu0 0.0
        %550 = vmatpush.msra.mxu0 0.0
        %551 = vmatpush.msra.mxu0 0.0
        %552 = vmatpush.msra.mxu0 0.0
        %553 = vmatpush.msra.mxu0 %v530
        %554 = vmatpush.msra.mxu0 %v529
        %555 = vmatpush.msra.mxu0 %v528
        %556 = vmatpush.msra.mxu0 %v527
        %557 = vmatmul.f32.gmra.mxu0 %v539
        %v558 = vpop.f32.mrf.mxu0
        %v559 = vadd.f32 %v536, %v558
        %560 = vdwg.mxu0
        %561 = vst [vmem:[%s334] sm:$0x3] %v559
        %s562 = sand.u32 %s230, 1
        %s563 = scalar_lea.sflag [#allocation3], %s562
        %s564 = sand.u32 %s230, 1
        %s565 = smul.addr %s564, 2
        %s566 = scalar_lea.vmem [#allocation2], %s565
        // Predicated region
        $region57: #{tpu_custom_call.1} parent=55 // pred_check
          %p567 = pneg %p240
        $region58: #{tpu_custom_call.1} parent=55 // pred_check_branch
          %569 = sbr.rel (%p567) target = $region60
        $region59: #{tpu_custom_call.1} parent=55 // pred_region
          %571 = vsyncadd %s563, 0
          %s572 = smul.addr %s23, 2
          %s573 = scalar_lea.hbm %s9, %s572
          %s575 = sshll.u32 %s566, 4
          %s576 = int_to_ptr.vmem [resolvable:$true] %s575
          %s577 = sshll.u32 %s573, 4
          %s578 = int_to_ptr.hbm [resolvable:$true] %s577
          %580 = dma.vmem_to_hbm [thread:$0]  %s576, 32, %s578, %s563
        $region60: #{tpu_custom_call.1} parent=55 // pred_fallthru
          _
      $region56: #{tpu_custom_call.1} parent=5 // pred_fallthru
        _
      %p581 = scmp.le.s32.totalorder 2, %s18
      // Predicated region
      $region61: #{tpu_custom_call.1} parent=5 // pred_check
        %p582 = pneg %p581
      $region62: #{tpu_custom_call.1} parent=5 // pred_check_branch
        %584 = sbr.rel (%p582) target = $region64
      $region63: #{tpu_custom_call.1} parent=5 // pred_region
        %s585 = ssub.s32 %s18, 2
        // Predicated region
        $region65: #{tpu_custom_call.1} parent=63 // pred_check
          %p586 = pneg %p246
        $region66: #{tpu_custom_call.1} parent=63 // pred_check_branch
          %588 = sbr.rel (%p586) target = $region68
        $region67: #{tpu_custom_call.1} parent=63 // pred_region
          %s589 = sand.u32 %s231, 1
          %s590 = scalar_lea.sflag [#allocation3], %s589
          %s591 = sand.u32 %s231, 1
          %s592 = smul.addr %s591, 2
          %s593 = scalar_lea.vmem [#allocation2], %s592
          %595 = dma.done %s590, 32
        $region68: #{tpu_custom_call.1} parent=63 // pred_fallthru
          _
      $region64: #{tpu_custom_call.1} parent=5 // pred_fallthru
        _
    $region6: #{tpu_custom_call.1} parent=1 // loop_footer
      %s22 = sadd.s32 1, %s18
    $region7: #{tpu_custom_call.1} parent=1 // loop_footer_branch
      %17 = sbr.rel target = $region3
    $region8: #{tpu_custom_call.1} parent=1 // loop_exit
      _
    %596 = vsyncpa [#allocation3], 1
    %s597 = scalar_lea.sflag [#allocation3], 1
    %598 = vsyncpa %s597, 1

</llo_original>
